<compile_context>
chip_gen: v5e
topology: v5e:2x2
jax: 0.10.0
libtpu: 0.0.40
codegen_flags: <defaults>
</compile_context>

<pallas_src>
import math

import jax
import jax.numpy as jnp
from jax.experimental import pallas as pl
from jax.experimental.pallas import tpu as pltpu

_LANES = 128
_VMEM_LIMIT_BYTES = 32 * 1024 * 1024      # scoped VMEM cap (raises v5e's 16 MiB default)
_BUFFER_BUDGET_BYTES = 24 * 1024 * 1024   # in+out double-buffers; headroom for v7x (64 MiB phys)


def _softmax_dim0_kernel(x_ref, o_ref):
    """Stable softmax over axis 0 of an (N, TILE_D) block (columns independent)."""
    x = x_ref[...].astype(jnp.float32)
    x_max = jnp.max(x, axis=0, keepdims=True)
    x_exp = jnp.exp(x - x_max)
    partition = jnp.sum(x_exp, axis=0, keepdims=True)
    # approx reciprocal lowers to the (otherwise idle) EUP vrcp slot.
    o_ref[...] = (x_exp * pl.reciprocal(partition, approx=True)).astype(o_ref.dtype)


def _softmax_lastdim_kernel(x_ref, o_ref):
    """Stable softmax over the last (lane) axis of the block (rows independent)."""
    x = x_ref[...].astype(jnp.float32)
    x_max = jnp.max(x, axis=-1, keepdims=True)
    x_exp = jnp.exp(x - x_max)
    partition = jnp.sum(x_exp, axis=-1, keepdims=True)
    o_ref[...] = (x_exp * pl.reciprocal(partition, approx=True)).astype(o_ref.dtype)


def _cost(n, d, itemsize):
    return pl.CostEstimate(
        flops=4 * n * d,
        transcendentals=n * d,
        bytes_accessed=2 * n * d * itemsize,
    )


def _pick_tile_d(n, d_pad, in_bytes, out_bytes):
    """Largest lane-dense tile whose double-buffered in+out footprint fits budget."""
    candidates = sorted({d_pad, 4096, 2048, 1024, 512, 256, 128}, reverse=True)
    for cand in candidates:
        if cand <= d_pad and d_pad % cand == 0 and cand % _LANES == 0:
            if 2 * n * cand * (in_bytes + out_bytes) <= _BUFFER_BUDGET_BYTES:
                return cand
    # TODO(synk): for huge N even a 128-wide column block exceeds the budget;
    # that case needs a second grid axis over N with an online (running-max /
    # rescaled-sum) accumulator in VMEM scratch.  Fall back to the minimum
    # lane-dense tile.
    return _LANES


def softmax_stable(x):
    """Stable softmax over axis 0, matching SoftmaxStable.forward."""
    orig_shape = x.shape
    dtype = x.dtype
    N = x.shape[0]
    D = int(math.prod(x.shape[1:]))  # == 1 for 1-D inputs
    itemsize = jnp.dtype(dtype).itemsize

    if D < _LANES:
        # Lane-dense path for skinny / 1-D inputs: put the reduction axis on
        # the 128-lane dimension so stores are unmasked (reshape is free for
        # D==1; the small-D transpose is pure layout plumbing).
        if D == 1:
            xr = x.reshape(1, N)
        else:
            xr = jnp.transpose(x.reshape(N, D))  # (D, N)
        rows, cols = xr.shape
        out = pl.pallas_call(
            _softmax_lastdim_kernel,
            out_shape=jax.ShapeDtypeStruct((rows, cols), dtype),
            grid_spec=pltpu.PrefetchScalarGridSpec(
                num_scalar_prefetch=0,
                grid=(1,),
                in_specs=[pl.BlockSpec((rows, cols), lambda i: (0, 0))],
                out_specs=pl.BlockSpec((rows, cols), lambda i: (0, 0)),
            ),
            compiler_params=pltpu.CompilerParams(
                dimension_semantics=("arbitrary",),
                vmem_limit_bytes=_VMEM_LIMIT_BYTES,
            ),
            cost_estimate=_cost(N, D, itemsize),
        )(xr)
        if D == 1:
            return out.reshape(orig_shape)
        return jnp.transpose(out).reshape(orig_shape)

    # Main path: tile the non-reduced axis D into lane-dense blocks; the
    # reduction axis (0) is fully resident in every block.
    x2 = x.reshape(N, D)
    d_pad = ((D + _LANES - 1) // _LANES) * _LANES
    if d_pad != D:
        # Columns are independent; zero-padded columns are sliced off below.
        x2 = jnp.pad(x2, ((0, 0), (0, d_pad - D)))
    tile_d = _pick_tile_d(N, d_pad, itemsize, itemsize)
    grid = (d_pad // tile_d,)

    out = pl.pallas_call(
        _softmax_dim0_kernel,
        out_shape=jax.ShapeDtypeStruct((N, d_pad), dtype),
        grid_spec=pltpu.PrefetchScalarGridSpec(
            num_scalar_prefetch=0,
            grid=grid,
            in_specs=[pl.BlockSpec((N, tile_d), lambda j: (0, j))],
            out_specs=pl.BlockSpec((N, tile_d), lambda j: (0, j)),
        ),
        compiler_params=pltpu.CompilerParams(
            # Tiled D axis is trivially parallel -> sharded across the two
            # TensorCores on v7x; harmless on v5e/v6e.
            dimension_semantics=("parallel",),
            vmem_limit_bytes=_VMEM_LIMIT_BYTES,
        ),
        cost_estimate=_cost(N, d_pad, itemsize),
    )(x2)

    if d_pad != D:
        out = out[:, :D]
    return out.reshape(orig_shape)


def _reference(x):
    x_max = jnp.max(x, axis=0, keepdims=True)
    x_exp = jnp.exp(x - x_max)
    return x_exp / jnp.sum(x_exp, axis=0, keepdims=True)


if __name__ == "__main__":
    key = jax.random.PRNGKey(0)
    # Small shapes consistent with the module (softmax over dim=0):
    #  - (8, 32): skinny lane-dense (transposed) path
    #  - (16, 256): main tiled path, D multiple of 128
    #  - (8, 2, 100): main path with padding (flattened D=200 -> 256)
    #  - (64,): 1-D path
    shapes = [(8, 32), (16, 256), (8, 2, 100), (64,)]
    keys = jax.random.split(key, len(shapes))

    for k, shp in zip(keys, shapes):
        x = jax.random.normal(k, shp, dtype=jnp.float32)
        y = jax.block_until_ready(softmax_stable(x))
        ref = _reference(x)
        assert y.shape == x.shape, (y.shape, x.shape)
        # approx reciprocal -> slightly looser tolerance than exact division
        assert jnp.allclose(y, ref, atol=5e-3, rtol=5e-3), f"mismatch for shape {shp}"
        col_sums = jnp.sum(y, axis=0)
        assert jnp.allclose(col_sums, jnp.ones_like(col_sums), atol=5e-3), (
            f"columns do not sum to 1 for shape {shp}"
        )

    print("KERNEL_OK")
</pallas_src>

<mosaic_0001>
module attributes {stable_mosaic.version = 11 : i64} {
  func.func @_softmax_lastdim_kernel(%arg0: i32, %arg1: memref<32x8xf32, #tpu.memory_space<vmem>>, %arg2: memref<32x8xf32, #tpu.memory_space<vmem>>) attributes {dimension_semantics = [#tpu.dimension_semantics<arbitrary>], iteration_bounds = array<i64: 1>, scalar_prefetch = 0 : i64, scratch_operands = 0 : i64, tpu.core_type = #tpu.core_type<tc>, window_params = [{pipeline_mode = #tpu.pipeline_mode<synchronous>, transform_indices = @transform_0, window_bounds = array<i64: 32, 8>}, {pipeline_mode = #tpu.pipeline_mode<synchronous>, transform_indices = @transform_1, window_bounds = array<i64: 32, 8>}]} {
    %c0 = arith.constant 0 : index
    %c0_0 = arith.constant 0 : index
    %0 = vector.load %arg1[%c0, %c0_0] : memref<32x8xf32, #tpu.memory_space<vmem>>, vector<32x8xf32>
    %cst = arith.constant dense<0xFF800000> : vector<32xf32>
    %1 = vector.multi_reduction <maximumf>, %0, %cst [1] : vector<32x8xf32> to vector<32xf32>
    %2 = vector.shape_cast %1 : vector<32xf32> to vector<32x1xf32>
    %3 = vector.broadcast %2 : vector<32x1xf32> to vector<32x8xf32>
    %4 = arith.subf %0, %3 : vector<32x8xf32>
    %5 = math.exp %4 : vector<32x8xf32>
    %cst_1 = arith.constant dense<0.000000e+00> : vector<32xf32>
    %6 = vector.multi_reduction <add>, %5, %cst_1 [1] : vector<32x8xf32> to vector<32xf32>
    %7 = vector.shape_cast %6 : vector<32xf32> to vector<32x1xf32>
    %8 = tpu.reciprocal %7 {approx = true} : vector<32x1xf32> -> vector<32x1xf32>
    %9 = vector.broadcast %8 : vector<32x1xf32> to vector<32x8xf32>
    %10 = arith.mulf %5, %9 : vector<32x8xf32>
    %c0_2 = arith.constant 0 : index
    %c0_3 = arith.constant 0 : index
    %11 = vector.load %arg2[%c0_2, %c0_3] : memref<32x8xf32, #tpu.memory_space<vmem>>, vector<32x8xf32>
    tpu.vector_store %arg2[%c0_2, %c0_3], %10 {strides = array<i32>} : memref<32x8xf32, #tpu.memory_space<vmem>>, vector<32x8xf32>,
    return
  }
  func.func @transform_0(%arg0: i32) -> (i32, i32) {
    %c0_i32 = arith.constant 0 : i32
    %c0_i32_0 = arith.constant 0 : i32
    %c0_i32_1 = arith.constant 0 : i32
    return %c0_i32, %c0_i32_0 : i32, i32
  }
  func.func @transform_1(%arg0: i32) -> (i32, i32) {
    %c0_i32 = arith.constant 0 : i32
    %c0_i32_0 = arith.constant 0 : i32
    %c0_i32_1 = arith.constant 0 : i32
    return %c0_i32, %c0_i32_0 : i32, i32
  }
}

</mosaic_0001>

<llo_original>
// kernel: tpu_custom_call.1
$region0: #{tpu_custom_call.1}
  #allocation0 [shape = 'u32[]', space=smem, size = 0x4, offset = 0x4, fixed_abs, tag = 'smem constant byte address 0x4 - core index']
  #allocation1 [shape = 'u32[72,128]{1,0:T(1,128)}', space=vmem, size = 0x9000, scoped, tag = 'internal scratch']
  %s0 = inlined_call_operand.vmem [shape: f32[32,8], index: 0, kind: input, shape index: {}]
  %s1 = inlined_call_operand.vmem [shape: f32[32,8], index: 1, kind: output, shape index: {}]
  %s2 = sld [smem:[#allocation0]]
  $region14: #{tpu_custom_call.1} parent=0
    _
  %s4 = ssub.s32 1, %s2
  %s5 = scalar_select 0, %s4, %s2
  // Predicated region
  $region2: #{tpu_custom_call.1} parent=0 // pred_check
    _
  $region3: #{tpu_custom_call.1} parent=0 // pred_check_branch
    %7 = sbr.rel (0) target = $region5
  $region4: #{tpu_custom_call.1} parent=0 // pred_region
    _
  $region5: #{tpu_custom_call.1} parent=0 // pred_fallthru
    _
  %v8 = vld [vmem:[%s0] sm:$0xff]
  %v9 = vld [vmem:[%s0 + $0x8] sm:$0xff]
  %v10 = vld [vmem:[%s0 + $0x10] sm:$0xff]
  %v11 = vld [vmem:[%s0 + $0x18] sm:$0xff]
  %vm12 = vcmask 64512
  %v13 = vsel %vm12, %v8, -inf
  %14 = vmax.xlane.f32.xlu0 %v13
  %v15 = vpop.xlane.xlu0 %14
  %v16 = vsel %vm12, %v9, -inf
  %17 = vmax.xlane.f32.xlu0 %v16
  %v18 = vpop.xlane.xlu0 %17
  %v19 = vsel %vm12, %v10, -inf
  %20 = vmax.xlane.f32.xlu0 %v19
  %v21 = vpop.xlane.xlu0 %20
  %v22 = vsel %vm12, %v11, -inf
  %23 = vmax.xlane.f32.xlu0 %v22
  %v24 = vpop.xlane.xlu0 %23
  %v25 = vsub.f32 %v8, %v15
  %v26 = vsub.f32 %v9, %v18
  %v27 = vsub.f32 %v10, %v21
  %v28 = vsub.f32 %v11, %v24
  %v29 = vmul.f32 %v25, 1.442695
  %v30 = vpow.pop %v29
  %v31 = vmul.f32 %v26, 1.442695
  %v32 = vpow.pop %v31
  %v33 = vmul.f32 %v27, 1.442695
  %v34 = vpow.pop %v33
  %v35 = vmul.f32 %v28, 1.442695
  %v36 = vpow.pop %v35
  %v37 = vsel %vm12, %v30, 0.0
  %38 = vadd.xlane.f32.xlu0 %v37
  %v39 = vpop.xlane.xlu0 %38
  %v40 = vsel %vm12, %v32, 0.0
  %41 = vadd.xlane.f32.xlu0 %v40
  %v42 = vpop.xlane.xlu0 %41
  %v43 = vsel %vm12, %v34, 0.0
  %44 = vadd.xlane.f32.xlu0 %v43
  %v45 = vpop.xlane.xlu0 %44
  %v46 = vsel %vm12, %v36, 0.0
  %47 = vadd.xlane.f32.xlu0 %v46
  %v48 = vpop.xlane.xlu0 %47
  %v49 = vrcp.pop %v39
  %v50 = vrcp.pop %v42
  %v51 = vrcp.pop %v45
  %v52 = vrcp.pop %v48
  %v53 = vmul.f32 %v30, %v49
  %v54 = vmul.f32 %v32, %v50
  %v55 = vmul.f32 %v34, %v51
  %v56 = vmul.f32 %v36, %v52
  %57 = vst.msk [vmem:[%s1] sm:$0xff] %vm12, %v53
  %58 = vst.msk [vmem:[%s1 + $0x8] sm:$0xff] %vm12, %v54
  %59 = vst.msk [vmem:[%s1 + $0x10] sm:$0xff] %vm12, %v55
  %60 = vst.msk [vmem:[%s1 + $0x18] sm:$0xff] %vm12, %v56
  // Predicated region
  $region6: #{tpu_custom_call.1} parent=0 // pred_check
    _
  $region7: #{tpu_custom_call.1} parent=0 // pred_check_branch
    %62 = sbr.rel (0) target = $region9
  $region8: #{tpu_custom_call.1} parent=0 // pred_region
    _
  $region9: #{tpu_custom_call.1} parent=0 // pred_fallthru
    _
  // Predicated region
  $region10: #{tpu_custom_call.1} parent=0 // pred_check
    _
  $region11: #{tpu_custom_call.1} parent=0 // pred_check_branch
    %64 = sbr.rel (0) target = $region13
  $region12: #{tpu_custom_call.1} parent=0 // pred_region
    _
  $region13: #{tpu_custom_call.1} parent=0 // pred_fallthru
    _

</llo_original>
